<compile_context>
chip_gen: v6e
topology: v6e:2x2x1
jax: 0.10.0
libtpu: 0.0.40
codegen_flags: <defaults>
</compile_context>

<pallas_src>
import functools

import jax
import jax.numpy as jnp
from jax.experimental import pallas as pl
from jax.experimental.pallas import tpu as pltpu


# ---------------------------------------------------------------------------
# Kernel
# ---------------------------------------------------------------------------
def _layer_norm(y, w, b, eps=1e-5):
    mu = jnp.mean(y, axis=-1, keepdims=True)
    var = jnp.mean((y - mu) ** 2, axis=-1, keepdims=True)
    return (y - mu) * jax.lax.rsqrt(var + eps) * w + b


def encoder_kernel(x_ref, wqkv_ref, bqkv_ref, w1_ref, b1_ref, w2_ref, b2_ref,
                   lnw_ref, lnb_ref, o_ref, x_sc, mh_sc, *,
                   nb_heads, dim_key, dim_value, dim_model):
    layer = pl.program_id(0)

    # Layer 0: load the input activations into the VMEM-resident carry.
    @pl.when(layer == 0)
    def _():
        x_sc[...] = x_ref[...]

    x = x_sc[...]                                      # [S, D]
    inv_dm = jnp.float32(1.0 / dim_model)              # reference scales by 1/dim_model

    # --- fused Q/K/V projection for all heads: one wide matmul ------------
    # Wqkv layout along the last axis: [ Q(H*dk) | K(H*dk) | V(H*dv) ]
    qkv = jnp.dot(x, wqkv_ref[...], preferred_element_type=jnp.float32) + bqkv_ref[...]

    q_off = 0
    k_off = nb_heads * dim_key
    v_off = 2 * nb_heads * dim_key

    # --- per-head scaled dot-product attention (static unroll, tiny H) ----
    for h in range(nb_heads):
        q = qkv[:, q_off + h * dim_key: q_off + (h + 1) * dim_key]       # [S, dk]
        k = qkv[:, k_off + h * dim_key: k_off + (h + 1) * dim_key]       # [S, dk]
        v = qkv[:, v_off + h * dim_value: v_off + (h + 1) * dim_value]   # [S, dv]

        s = jnp.dot(q, k.T, preferred_element_type=jnp.float32) * inv_dm  # [S, S]
        s = s - jnp.max(s, axis=-1, keepdims=True)
        p = jnp.exp(s)
        # EUP approximate reciprocal instead of a broadcast VALU divide.
        p = p * pl.reciprocal(jnp.sum(p, axis=-1, keepdims=True), approx=True)

        # Write head output straight into its column slice (no lane concat).
        mh_sc[:, h * dim_value:(h + 1) * dim_value] = jnp.dot(
            p, v, preferred_element_type=jnp.float32)

    lnw = lnw_ref[...]                                  # [1, D]
    lnb = lnb_ref[...]                                  # [1, D]

    # addAndNorm(x, dropout(MHA(x)), norm) -- dropout is identity in eval mode
    h1 = _layer_norm(x + mh_sc[...], lnw, lnb)

    # --- feedforward: Linear -> ReLU -> Linear -----------------------------
    ff = jnp.dot(h1, w1_ref[...], preferred_element_type=jnp.float32) + b1_ref[...]
    ff = jnp.maximum(ff, 0.0)
    ff = jnp.dot(ff, w2_ref[...], preferred_element_type=jnp.float32) + b2_ref[...]

    # addAndNorm(h1, dropout(FFN(h1)), norm)
    out = _layer_norm(h1 + ff, lnw, lnb)

    x_sc[...] = out                                     # carry to next layer

    @pl.when(layer == pl.num_programs(0) - 1)
    def _():
        o_ref[...] = out


# ---------------------------------------------------------------------------
# Wrapper: single pallas_call over a layer grid
# ---------------------------------------------------------------------------
def encoder_forward(x, packed, *, nb_heads, dim_key, dim_value):
    S, D = x.shape
    wqkv, bqkv, w1, b1, w2, b2, lnw, lnb = packed
    L = wqkv.shape[0]
    dqkv = wqkv.shape[-1]
    F = w1.shape[-1]

    kernel = functools.partial(encoder_kernel, nb_heads=nb_heads,
                               dim_key=dim_key, dim_value=dim_value, dim_model=D)

    def per_layer(shape):
        # [L, a, b] -> one layer's slab per grid step, layer dim squeezed out.
        return pl.BlockSpec((None,) + tuple(shape[1:]), lambda l: (l, 0, 0))

    def resident(shape):
        # Same block every grid step -> stays resident in VMEM across layers.
        return pl.BlockSpec(tuple(shape), lambda l: (0, 0))

    # Rough advisory cost estimate for the XLA scheduler.
    flops_per_layer = (2 * S * D * dqkv
                       + nb_heads * 2 * S * S * (dim_key + dim_value)
                       + 4 * S * D * F
                       + 10 * S * D)
    trans_per_layer = nb_heads * S * S + nb_heads * S + 2 * S
    bytes_accessed = int(sum(int(a.size) * a.dtype.itemsize for a in (x, *packed))
                         + S * D * 4)

    return pl.pallas_call(
        kernel,
        out_shape=jax.ShapeDtypeStruct((S, D), jnp.float32),
        grid=(L,),
        in_specs=[
            resident((S, D)),                 # x (only consumed at layer 0)
            per_layer(wqkv.shape), per_layer(bqkv.shape),
            per_layer(w1.shape), per_layer(b1.shape),
            per_layer(w2.shape), per_layer(b2.shape),
            resident((1, D)), resident((1, D)),   # shared LayerNorm affine params
        ],
        out_specs=resident((S, D)),
        scratch_shapes=[
            pltpu.VMEM((S, D), jnp.float32),   # x carry across layers
            pltpu.VMEM((S, D), jnp.float32),   # multi-head output (no lane concat)
        ],
        compiler_params=pltpu.CompilerParams(
            dimension_semantics=("arbitrary",)),   # layer loop is sequential
        cost_estimate=pl.CostEstimate(
            flops=L * flops_per_layer,
            transcendentals=L * trans_per_layer,
            bytes_accessed=bytes_accessed),
    )(x, wqkv, bqkv, w1, b1, w2, b2, lnw, lnb)


# ---------------------------------------------------------------------------
# Pure-JAX reference (for correctness check only) -- kept per-head / per-layer
# ---------------------------------------------------------------------------
def encoder_forward_ref(x, params, *, nb_heads):
    def ln(y, w, b, eps=1e-5):
        mu = jnp.mean(y, axis=-1, keepdims=True)
        var = jnp.mean((y - mu) ** 2, axis=-1, keepdims=True)
        return (y - mu) / jnp.sqrt(var + eps) * w + b

    lnw, lnb = params["ln"]
    D = x.shape[-1]
    for (wq, bq, wk, bk, wv, bv, w1, b1, w2, b2) in params["layers"]:
        heads = []
        for h in range(nb_heads):
            q = x @ wq[h] + bq[h]
            k = x @ wk[h] + bk[h]
            v = x @ wv[h] + bv[h]
            s = (q @ k.T) / D
            p = jax.nn.softmax(s, axis=-1)
            heads.append(p @ v)
        mh = jnp.concatenate(heads, axis=1)
        h1 = ln(x + mh, lnw, lnb)
        ff = jnp.maximum(h1 @ w1 + b1, 0.0) @ w2 + b2
        x = ln(h1 + ff, lnw, lnb)
    return x


# ---------------------------------------------------------------------------
# Deterministic parameter construction (PyTorch-Linear-style uniform init)
# ---------------------------------------------------------------------------
def _linear_params(key, fan_in, fan_out):
    """Returns (W [fan_in, fan_out], b [1, fan_out]) -- already transposed for x @ W."""
    kw, kb = jax.random.split(key)
    bound = 1.0 / (fan_in ** 0.5)
    w = jax.random.uniform(kw, (fan_in, fan_out), jnp.float32, -bound, bound)
    b = jax.random.uniform(kb, (1, fan_out), jnp.float32, -bound, bound)
    return w, b


def make_params(key, *, nb_layers, nb_heads, dim_key, dim_value, dim_ff):
    dim_model = nb_heads * dim_key
    layers = []
    for _ in range(nb_layers):
        wq_l, bq_l, wk_l, bk_l, wv_l, bv_l = [], [], [], [], [], []
        for _h in range(nb_heads):
            key, k1, k2, k3 = jax.random.split(key, 4)
            w, b = _linear_params(k1, dim_model, dim_key); wq_l.append(w); bq_l.append(b)
            w, b = _linear_params(k2, dim_model, dim_key); wk_l.append(w); bk_l.append(b)
            w, b = _linear_params(k3, dim_model, dim_value); wv_l.append(w); bv_l.append(b)
        key, k1, k2 = jax.random.split(key, 3)
        w1, b1 = _linear_params(k1, dim_model, dim_ff)
        w2, b2 = _linear_params(k2, dim_ff, dim_model)
        layers.append((
            jnp.stack(wq_l), jnp.stack(bq_l),      # [H, D, dk], [H, 1, dk]
            jnp.stack(wk_l), jnp.stack(bk_l),
            jnp.stack(wv_l), jnp.stack(bv_l),
            w1, b1, w2, b2,
        ))
    lnw = jnp.ones((1, dim_model), jnp.float32)    # shared LayerNorm affine params
    lnb = jnp.zeros((1, dim_model), jnp.float32)
    return {"layers": layers, "ln": (lnw, lnb)}


def pack_params(params):
    """Stack per-layer params on a leading layer axis and fuse Q/K/V weights."""
    wqkv_l, bqkv_l, w1_l, b1_l, w2_l, b2_l = [], [], [], [], [], []
    for (wq, bq, wk, bk, wv, bv, w1, b1, w2, b2) in params["layers"]:
        H, D, _ = wq.shape
        # [H, D, d] -> [D, H*d] (heads concatenated along the output axis)
        def heads_cat(w):
            return jnp.concatenate([w[h] for h in range(w.shape[0])], axis=1)
        wqkv = jnp.concatenate([heads_cat(wq), heads_cat(wk), heads_cat(wv)], axis=1)
        bqkv = jnp.concatenate([heads_cat(bq), heads_cat(bk), heads_cat(bv)], axis=1)
        wqkv_l.append(wqkv); bqkv_l.append(bqkv)
        w1_l.append(w1); b1_l.append(b1); w2_l.append(w2); b2_l.append(b2)
    lnw, lnb = params["ln"]
    return (jnp.stack(wqkv_l), jnp.stack(bqkv_l),
            jnp.stack(w1_l), jnp.stack(b1_l),
            jnp.stack(w2_l), jnp.stack(b2_l),
            lnw, lnb)


# ---------------------------------------------------------------------------
if __name__ == "__main__":
    # encoderConfig: nb_layers=2, dim_model=32, dim_feedforward=64,
    #                multihead: nb_heads=2, dim_key=16, dim_value=16
    NB_LAYERS = 2
    NB_HEADS = 2
    DIM_KEY = 16
    DIM_VALUE = 16
    DIM_FF = 64
    DIM_MODEL = NB_HEADS * DIM_KEY     # 32
    SEQ = 8

    key = jax.random.PRNGKey(0)
    key, xkey, pkey = jax.random.split(key, 3)

    x = jax.random.normal(xkey, (SEQ, DIM_MODEL), jnp.float32)
    params = make_params(pkey, nb_layers=NB_LAYERS, nb_heads=NB_HEADS,
                         dim_key=DIM_KEY, dim_value=DIM_VALUE, dim_ff=DIM_FF)
    packed = pack_params(params)

    out = encoder_forward(x, packed, nb_heads=NB_HEADS,
                          dim_key=DIM_KEY, dim_value=DIM_VALUE)
    out = jax.block_until_ready(out)

    ref = encoder_forward_ref(x, params, nb_heads=NB_HEADS)
    assert out.shape == (SEQ, DIM_MODEL)
    # Tolerance 1e-3: the EUP approximate reciprocal in the softmax denominator
    # introduces a small (sub-1e-3) deviation vs the exact-division reference.
    assert jnp.allclose(out, ref, atol=1e-3, rtol=1e-3), "Pallas output mismatch vs reference"

    # TODO(synk): nn.Dropout(0.1) is applied as identity (inference mode); no stochastic masking.
    print("KERNEL_OK")
</pallas_src>

<mosaic_0001>
module attributes {stable_mosaic.version = 11 : i64} {
  func.func @encoder_kernel(%arg0: i32, %arg1: memref<8x32xf32, #tpu.memory_space<vmem>>, %arg2: memref<1x32x96xf32, #tpu.memory_space<vmem>>, %arg3: memref<1x1x96xf32, #tpu.memory_space<vmem>>, %arg4: memref<1x32x64xf32, #tpu.memory_space<vmem>>, %arg5: memref<1x1x64xf32, #tpu.memory_space<vmem>>, %arg6: memref<1x64x32xf32, #tpu.memory_space<vmem>>, %arg7: memref<1x1x32xf32, #tpu.memory_space<vmem>>, %arg8: memref<1x32xf32, #tpu.memory_space<vmem>>, %arg9: memref<1x32xf32, #tpu.memory_space<vmem>>, %arg10: memref<8x32xf32, #tpu.memory_space<vmem>>, %arg11: memref<8x32xf32, #tpu.memory_space<vmem>>, %arg12: memref<8x32xf32, #tpu.memory_space<vmem>>) attributes {dimension_semantics = [#tpu.dimension_semantics<arbitrary>], iteration_bounds = array<i64: 2>, scalar_prefetch = 0 : i64, scratch_operands = 2 : i64, tpu.core_type = #tpu.core_type<tc>, window_params = [{pipeline_mode = #tpu.pipeline_mode<synchronous>, transform_indices = @transform_0, window_bounds = array<i64: 8, 32>}, {transform_indices = @transform_1, window_bounds = array<i64: 1, 32, 96>}, {transform_indices = @transform_2, window_bounds = array<i64: 1, 1, 96>}, {transform_indices = @transform_3, window_bounds = array<i64: 1, 32, 64>}, {transform_indices = @transform_4, window_bounds = array<i64: 1, 1, 64>}, {transform_indices = @transform_5, window_bounds = array<i64: 1, 64, 32>}, {transform_indices = @transform_6, window_bounds = array<i64: 1, 1, 32>}, {pipeline_mode = #tpu.pipeline_mode<synchronous>, transform_indices = @transform_7, window_bounds = array<i64: 1, 32>}, {pipeline_mode = #tpu.pipeline_mode<synchronous>, transform_indices = @transform_8, window_bounds = array<i64: 1, 32>}, {pipeline_mode = #tpu.pipeline_mode<synchronous>, transform_indices = @transform_9, window_bounds = array<i64: 8, 32>}]} {
    %c0_i32 = arith.constant 0 : i32
    %0 = arith.cmpi eq, %arg0, %c0_i32 : i32
    %1 = arith.extui %0 : i1 to i32
    %c0_i32_0 = arith.constant 0 : i32
    %2 = arith.cmpi ne, %1, %c0_i32_0 : i32
    scf.if %2 {
      %c0_55 = arith.constant 0 : index
      %c0_56 = arith.constant 0 : index
      %118 = vector.load %arg1[%c0_55, %c0_56] : memref<8x32xf32, #tpu.memory_space<vmem>>, vector<8x32xf32>
      %c0_57 = arith.constant 0 : index
      %c0_58 = arith.constant 0 : index
      %119 = vector.load %arg11[%c0_57, %c0_58] : memref<8x32xf32, #tpu.memory_space<vmem>>, vector<8x32xf32>
      tpu.vector_store %arg11[%c0_57, %c0_58], %118 {strides = array<i32>} : memref<8x32xf32, #tpu.memory_space<vmem>>, vector<8x32xf32>,
    } else {
    }
    %c0 = arith.constant 0 : index
    %c0_1 = arith.constant 0 : index
    %3 = vector.load %arg11[%c0, %c0_1] : memref<8x32xf32, #tpu.memory_space<vmem>>, vector<8x32xf32>
    %c0_2 = arith.constant 0 : index
    %c0_3 = arith.constant 0 : index
    %c0_4 = arith.constant 0 : index
    %4 = vector.load %arg2[%c0_2, %c0_3, %c0_4] : memref<1x32x96xf32, #tpu.memory_space<vmem>>, vector<1x32x96xf32>
    %5 = vector.shape_cast %4 : vector<1x32x96xf32> to vector<32x96xf32>
    %cst = arith.constant dense<0.000000e+00> : vector<8x96xf32>
    %6 = tpu.matmul %3, %5, %cst {dimension_numbers = #tpu.dot_dimension_numbers<[1], [0], [0], [1], [0, 0, 1, 1], [], []>} : vector<8x32xf32>, vector<32x96xf32>, vector<8x96xf32> -> vector<8x96xf32>
    %c0_5 = arith.constant 0 : index
    %c0_6 = arith.constant 0 : index
    %c0_7 = arith.constant 0 : index
    %7 = vector.load %arg3[%c0_5, %c0_6, %c0_7] : memref<1x1x96xf32, #tpu.memory_space<vmem>>, vector<1x1x96xf32>
    %8 = vector.shape_cast %7 : vector<1x1x96xf32> to vector<1x96xf32>
    %9 = vector.broadcast %8 : vector<1x96xf32> to vector<8x96xf32>
    %10 = arith.addf %6, %9 : vector<8x96xf32>
    %11 = vector.extract_strided_slice %10 {offsets = [0, 0], sizes = [8, 16], strides = [1, 1]} : vector<8x96xf32> to vector<8x16xf32>
    %12 = vector.extract_strided_slice %10 {offsets = [0, 32], sizes = [8, 16], strides = [1, 1]} : vector<8x96xf32> to vector<8x16xf32>
    %13 = vector.extract_strided_slice %10 {offsets = [0, 64], sizes = [8, 16], strides = [1, 1]} : vector<8x96xf32> to vector<8x16xf32>
    %14 = tpu.transpose %12, [1, 0] : vector<8x16xf32> -> vector<16x8xf32>
    %cst_8 = arith.constant dense<0.000000e+00> : vector<8x8xf32>
    %15 = tpu.matmul %11, %14, %cst_8 {dimension_numbers = #tpu.dot_dimension_numbers<[1], [0], [0], [1], [0, 0, 1, 1], [], []>} : vector<8x16xf32>, vector<16x8xf32>, vector<8x8xf32> -> vector<8x8xf32>
    %cst_9 = arith.constant 3.125000e-02 : f32
    %16 = vector.broadcast %cst_9 : f32 to vector<8x8xf32>
    %17 = arith.mulf %15, %16 : vector<8x8xf32>
    %cst_10 = arith.constant dense<0xFF800000> : vector<8xf32>
    %18 = vector.multi_reduction <maximumf>, %17, %cst_10 [1] : vector<8x8xf32> to vector<8xf32>
    %19 = vector.shape_cast %18 : vector<8xf32> to vector<8x1xf32>
    %20 = vector.broadcast %19 : vector<8x1xf32> to vector<8x8xf32>
    %21 = arith.subf %17, %20 : vector<8x8xf32>
    %22 = math.exp %21 : vector<8x8xf32>
    %cst_11 = arith.constant dense<0.000000e+00> : vector<8xf32>
    %23 = vector.multi_reduction <add>, %22, %cst_11 [1] : vector<8x8xf32> to vector<8xf32>
    %24 = vector.shape_cast %23 : vector<8xf32> to vector<8x1xf32>
    %25 = tpu.reciprocal %24 {approx = true} : vector<8x1xf32> -> vector<8x1xf32>
    %26 = vector.broadcast %25 : vector<8x1xf32> to vector<8x8xf32>
    %27 = arith.mulf %22, %26 : vector<8x8xf32>
    %cst_12 = arith.constant dense<0.000000e+00> : vector<8x16xf32>
    %28 = tpu.matmul %27, %13, %cst_12 {dimension_numbers = #tpu.dot_dimension_numbers<[1], [0], [0], [1], [0, 0, 1, 1], [], []>} : vector<8x8xf32>, vector<8x16xf32>, vector<8x16xf32> -> vector<8x16xf32>
    %c0_13 = arith.constant 0 : index
    %c0_14 = arith.constant 0 : index
    %29 = vector.load %arg12[%c0_13, %c0_14] : memref<8x32xf32, #tpu.memory_space<vmem>>, vector<8x16xf32>
    tpu.vector_store %arg12[%c0_13, %c0_14], %28 {strides = array<i32>} : memref<8x32xf32, #tpu.memory_space<vmem>>, vector<8x16xf32>,
    %30 = vector.extract_strided_slice %10 {offsets = [0, 16], sizes = [8, 16], strides = [1, 1]} : vector<8x96xf32> to vector<8x16xf32>
    %31 = vector.extract_strided_slice %10 {offsets = [0, 48], sizes = [8, 16], strides = [1, 1]} : vector<8x96xf32> to vector<8x16xf32>
    %32 = vector.extract_strided_slice %10 {offsets = [0, 80], sizes = [8, 16], strides = [1, 1]} : vector<8x96xf32> to vector<8x16xf32>
    %33 = tpu.transpose %31, [1, 0] : vector<8x16xf32> -> vector<16x8xf32>
    %cst_15 = arith.constant dense<0.000000e+00> : vector<8x8xf32>
    %34 = tpu.matmul %30, %33, %cst_15 {dimension_numbers = #tpu.dot_dimension_numbers<[1], [0], [0], [1], [0, 0, 1, 1], [], []>} : vector<8x16xf32>, vector<16x8xf32>, vector<8x8xf32> -> vector<8x8xf32>
    %cst_16 = arith.constant 3.125000e-02 : f32
    %35 = vector.broadcast %cst_16 : f32 to vector<8x8xf32>
    %36 = arith.mulf %34, %35 : vector<8x8xf32>
    %cst_17 = arith.constant dense<0xFF800000> : vector<8xf32>
    %37 = vector.multi_reduction <maximumf>, %36, %cst_17 [1] : vector<8x8xf32> to vector<8xf32>
    %38 = vector.shape_cast %37 : vector<8xf32> to vector<8x1xf32>
    %39 = vector.broadcast %38 : vector<8x1xf32> to vector<8x8xf32>
    %40 = arith.subf %36, %39 : vector<8x8xf32>
    %41 = math.exp %40 : vector<8x8xf32>
    %cst_18 = arith.constant dense<0.000000e+00> : vector<8xf32>
    %42 = vector.multi_reduction <add>, %41, %cst_18 [1] : vector<8x8xf32> to vector<8xf32>
    %43 = vector.shape_cast %42 : vector<8xf32> to vector<8x1xf32>
    %44 = tpu.reciprocal %43 {approx = true} : vector<8x1xf32> -> vector<8x1xf32>
    %45 = vector.broadcast %44 : vector<8x1xf32> to vector<8x8xf32>
    %46 = arith.mulf %41, %45 : vector<8x8xf32>
    %cst_19 = arith.constant dense<0.000000e+00> : vector<8x16xf32>
    %47 = tpu.matmul %46, %32, %cst_19 {dimension_numbers = #tpu.dot_dimension_numbers<[1], [0], [0], [1], [0, 0, 1, 1], [], []>} : vector<8x8xf32>, vector<8x16xf32>, vector<8x16xf32> -> vector<8x16xf32>
    %c0_20 = arith.constant 0 : index
    %c16 = arith.constant 16 : index
    %48 = vector.load %arg12[%c0_20, %c16] : memref<8x32xf32, #tpu.memory_space<vmem>>, vector<8x16xf32>
    tpu.vector_store %arg12[%c0_20, %c16], %47 {strides = array<i32>} : memref<8x32xf32, #tpu.memory_space<vmem>>, vector<8x16xf32>,
    %c0_21 = arith.constant 0 : index
    %c0_22 = arith.constant 0 : index
    %49 = vector.load %arg8[%c0_21, %c0_22] : memref<1x32xf32, #tpu.memory_space<vmem>>, vector<1x32xf32>
    %c0_23 = arith.constant 0 : index
    %c0_24 = arith.constant 0 : index
    %50 = vector.load %arg9[%c0_23, %c0_24] : memref<1x32xf32, #tpu.memory_space<vmem>>, vector<1x32xf32>
    %c0_25 = arith.constant 0 : index
    %c0_26 = arith.constant 0 : index
    %51 = vector.load %arg12[%c0_25, %c0_26] : memref<8x32xf32, #tpu.memory_space<vmem>>, vector<8x32xf32>
    %52 = arith.addf %3, %51 : vector<8x32xf32>
    %cst_27 = arith.constant dense<0.000000e+00> : vector<8xf32>
    %53 = vector.multi_reduction <add>, %52, %cst_27 [1] : vector<8x32xf32> to vector<8xf32>
    %54 = vector.shape_cast %53 : vector<8xf32> to vector<8x1xf32>
    %cst_28 = arith.constant 3.200000e+01 : f32
    %55 = vector.broadcast %cst_28 : f32 to vector<8x1xf32>
    %56 = arith.divf %54, %55 : vector<8x1xf32>
    %57 = vector.broadcast %56 : vector<8x1xf32> to vector<8x32xf32>
    %58 = arith.subf %52, %57 : vector<8x32xf32>
    %59 = arith.mulf %58, %58 : vector<8x32xf32>
    %cst_29 = arith.constant dense<0.000000e+00> : vector<8xf32>
    %60 = vector.multi_reduction <add>, %59, %cst_29 [1] : vector<8x32xf32> to vector<8xf32>
    %61 = vector.shape_cast %60 : vector<8xf32> to vector<8x1xf32>
    %cst_30 = arith.constant 3.200000e+01 : f32
    %62 = vector.broadcast %cst_30 : f32 to vector<8x1xf32>
    %63 = arith.divf %61, %62 : vector<8x1xf32>
    %64 = vector.broadcast %56 : vector<8x1xf32> to vector<8x32xf32>
    %65 = arith.subf %52, %64 : vector<8x32xf32>
    %cst_31 = arith.constant 9.99999974E-6 : f32
    %66 = vector.broadcast %cst_31 : f32 to vector<8x1xf32>
    %67 = arith.addf %63, %66 : vector<8x1xf32>
    %68 = math.rsqrt %67 : vector<8x1xf32>
    %69 = vector.broadcast %68 : vector<8x1xf32> to vector<8x32xf32>
    %70 = arith.mulf %65, %69 : vector<8x32xf32>
    %71 = vector.broadcast %49 : vector<1x32xf32> to vector<8x32xf32>
    %72 = arith.mulf %70, %71 : vector<8x32xf32>
    %73 = vector.broadcast %50 : vector<1x32xf32> to vector<8x32xf32>
    %74 = arith.addf %72, %73 : vector<8x32xf32>
    %c0_32 = arith.constant 0 : index
    %c0_33 = arith.constant 0 : index
    %c0_34 = arith.constant 0 : index
    %75 = vector.load %arg4[%c0_32, %c0_33, %c0_34] : memref<1x32x64xf32, #tpu.memory_space<vmem>>, vector<1x32x64xf32>
    %76 = vector.shape_cast %75 : vector<1x32x64xf32> to vector<32x64xf32>
    %cst_35 = arith.constant dense<0.000000e+00> : vector<8x64xf32>
    %77 = tpu.matmul %74, %76, %cst_35 {dimension_numbers = #tpu.dot_dimension_numbers<[1], [0], [0], [1], [0, 0, 1, 1], [], []>} : vector<8x32xf32>, vector<32x64xf32>, vector<8x64xf32> -> vector<8x64xf32>
    %c0_36 = arith.constant 0 : index
    %c0_37 = arith.constant 0 : index
    %c0_38 = arith.constant 0 : index
    %78 = vector.load %arg5[%c0_36, %c0_37, %c0_38] : memref<1x1x64xf32, #tpu.memory_space<vmem>>, vector<1x1x64xf32>
    %79 = vector.shape_cast %78 : vector<1x1x64xf32> to vector<1x64xf32>
    %80 = vector.broadcast %79 : vector<1x64xf32> to vector<8x64xf32>
    %81 = arith.addf %77, %80 : vector<8x64xf32>
    %cst_39 = arith.constant 0.000000e+00 : f32
    %82 = vector.broadcast %cst_39 : f32 to vector<8x64xf32>
    %83 = arith.maximumf %81, %82 : vector<8x64xf32>
    %c0_40 = arith.constant 0 : index
    %c0_41 = arith.constant 0 : index
    %c0_42 = arith.constant 0 : index
    %84 = vector.load %arg6[%c0_40, %c0_41, %c0_42] : memref<1x64x32xf32, #tpu.memory_space<vmem>>, vector<1x64x32xf32>
    %85 = vector.shape_cast %84 : vector<1x64x32xf32> to vector<64x32xf32>
    %cst_43 = arith.constant dense<0.000000e+00> : vector<8x32xf32>
    %86 = tpu.matmul %83, %85, %cst_43 {dimension_numbers = #tpu.dot_dimension_numbers<[1], [0], [0], [1], [0, 0, 1, 1], [], []>} : vector<8x64xf32>, vector<64x32xf32>, vector<8x32xf32> -> vector<8x32xf32>
    %c0_44 = arith.constant 0 : index
    %c0_45 = arith.constant 0 : index
    %c0_46 = arith.constant 0 : index
    %87 = vector.load %arg7[%c0_44, %c0_45, %c0_46] : memref<1x1x32xf32, #tpu.memory_space<vmem>>, vector<1x1x32xf32>
    %88 = vector.shape_cast %87 : vector<1x1x32xf32> to vector<1x32xf32>
    %89 = vector.broadcast %88 : vector<1x32xf32> to vector<8x32xf32>
    %90 = arith.addf %86, %89 : vector<8x32xf32>
    %91 = arith.addf %74, %90 : vector<8x32xf32>
    %cst_47 = arith.constant dense<0.000000e+00> : vector<8xf32>
    %92 = vector.multi_reduction <add>, %91, %cst_47 [1] : vector<8x32xf32> to vector<8xf32>
    %93 = vector.shape_cast %92 : vector<8xf32> to vector<8x1xf32>
    %cst_48 = arith.constant 3.200000e+01 : f32
    %94 = vector.broadcast %cst_48 : f32 to vector<8x1xf32>
    %95 = arith.divf %93, %94 : vector<8x1xf32>
    %96 = vector.broadcast %95 : vector<8x1xf32> to vector<8x32xf32>
    %97 = arith.subf %91, %96 : vector<8x32xf32>
    %98 = arith.mulf %97, %97 : vector<8x32xf32>
    %cst_49 = arith.constant dense<0.000000e+00> : vector<8xf32>
    %99 = vector.multi_reduction <add>, %98, %cst_49 [1] : vector<8x32xf32> to vector<8xf32>
    %100 = vector.shape_cast %99 : vector<8xf32> to vector<8x1xf32>
    %cst_50 = arith.constant 3.200000e+01 : f32
    %101 = vector.broadcast %cst_50 : f32 to vector<8x1xf32>
    %102 = arith.divf %100, %101 : vector<8x1xf32>
    %103 = vector.broadcast %95 : vector<8x1xf32> to vector<8x32xf32>
    %104 = arith.subf %91, %103 : vector<8x32xf32>
    %cst_51 = arith.constant 9.99999974E-6 : f32
    %105 = vector.broadcast %cst_51 : f32 to vector<8x1xf32>
    %106 = arith.addf %102, %105 : vector<8x1xf32>
    %107 = math.rsqrt %106 : vector<8x1xf32>
    %108 = vector.broadcast %107 : vector<8x1xf32> to vector<8x32xf32>
    %109 = arith.mulf %104, %108 : vector<8x32xf32>
    %110 = vector.broadcast %49 : vector<1x32xf32> to vector<8x32xf32>
    %111 = arith.mulf %109, %110 : vector<8x32xf32>
    %112 = vector.broadcast %50 : vector<1x32xf32> to vector<8x32xf32>
    %113 = arith.addf %111, %112 : vector<8x32xf32>
    %c0_52 = arith.constant 0 : index
    %c0_53 = arith.constant 0 : index
    %114 = vector.load %arg11[%c0_52, %c0_53] : memref<8x32xf32, #tpu.memory_space<vmem>>, vector<8x32xf32>
    tpu.vector_store %arg11[%c0_52, %c0_53], %113 {strides = array<i32>} : memref<8x32xf32, #tpu.memory_space<vmem>>, vector<8x32xf32>,
    %c1_i32 = arith.constant 1 : i32
    %115 = arith.cmpi eq, %arg0, %c1_i32 : i32
    %116 = arith.extui %115 : i1 to i32
    %c0_i32_54 = arith.constant 0 : i32
    %117 = arith.cmpi ne, %116, %c0_i32_54 : i32
    scf.if %117 {
      %c0_55 = arith.constant 0 : index
      %c0_56 = arith.constant 0 : index
      %118 = vector.load %arg10[%c0_55, %c0_56] : memref<8x32xf32, #tpu.memory_space<vmem>>, vector<8x32xf32>
      tpu.vector_store %arg10[%c0_55, %c0_56], %113 {strides = array<i32>} : memref<8x32xf32, #tpu.memory_space<vmem>>, vector<8x32xf32>,
    } else {
    }
    return
  }
  func.func @transform_0(%arg0: i32) -> (i32, i32) {
    %c0_i32 = arith.constant 0 : i32
    %c0_i32_0 = arith.constant 0 : i32
    %c0_i32_1 = arith.constant 0 : i32
    return %c0_i32, %c0_i32_0 : i32, i32
  }
  func.func @transform_1(%arg0: i32) -> (i32, i32, i32) {
    %c0_i32 = arith.constant 0 : i32
    %c0_i32_0 = arith.constant 0 : i32
    %c0_i32_1 = arith.constant 0 : i32
    return %arg0, %c0_i32, %c0_i32_0 : i32, i32, i32
  }
  func.func @transform_2(%arg0: i32) -> (i32, i32, i32) {
    %c0_i32 = arith.constant 0 : i32
    %c0_i32_0 = arith.constant 0 : i32
    %c0_i32_1 = arith.constant 0 : i32
    return %arg0, %c0_i32, %c0_i32_0 : i32, i32, i32
  }
  func.func @transform_3(%arg0: i32) -> (i32, i32, i32) {
    %c0_i32 = arith.constant 0 : i32
    %c0_i32_0 = arith.constant 0 : i32
    %c0_i32_1 = arith.constant 0 : i32
    return %arg0, %c0_i32, %c0_i32_0 : i32, i32, i32
  }
  func.func @transform_4(%arg0: i32) -> (i32, i32, i32) {
    %c0_i32 = arith.constant 0 : i32
    %c0_i32_0 = arith.constant 0 : i32
    %c0_i32_1 = arith.constant 0 : i32
    return %arg0, %c0_i32, %c0_i32_0 : i32, i32, i32
  }
  func.func @transform_5(%arg0: i32) -> (i32, i32, i32) {
    %c0_i32 = arith.constant 0 : i32
    %c0_i32_0 = arith.constant 0 : i32
    %c0_i32_1 = arith.constant 0 : i32
    return %arg0, %c0_i32, %c0_i32_0 : i32, i32, i32
  }
  func.func @transform_6(%arg0: i32) -> (i32, i32, i32) {
    %c0_i32 = arith.constant 0 : i32
    %c0_i32_0 = arith.constant 0 : i32
    %c0_i32_1 = arith.constant 0 : i32
    return %arg0, %c0_i32, %c0_i32_0 : i32, i32, i32
  }
  func.func @transform_7(%arg0: i32) -> (i32, i32) {
    %c0_i32 = arith.constant 0 : i32
    %c0_i32_0 = arith.constant 0 : i32
    %c0_i32_1 = arith.constant 0 : i32
    return %c0_i32, %c0_i32_0 : i32, i32
  }
  func.func @transform_8(%arg0: i32) -> (i32, i32) {
    %c0_i32 = arith.constant 0 : i32
    %c0_i32_0 = arith.constant 0 : i32
    %c0_i32_1 = arith.constant 0 : i32
    return %c0_i32, %c0_i32_0 : i32, i32
  }
  func.func @transform_9(%arg0: i32) -> (i32, i32) {
    %c0_i32 = arith.constant 0 : i32
    %c0_i32_0 = arith.constant 0 : i32
    %c0_i32_1 = arith.constant 0 : i32
    return %c0_i32, %c0_i32_0 : i32, i32
  }
}

</mosaic_0001>

<llo_original>
// kernel: tpu_custom_call.1
$region0: #{tpu_custom_call.1}
  #allocation0 [shape = 'u32[]', space=smem, size = 0x4, offset = 0x4, fixed_abs, tag = 'smem constant byte address 0x4 - core index']
  #allocation1 [shape = 'u32[144,128]{1,0:T(1,128)}', space=vmem, size = 0x12000, scoped, tag = 'internal scratch']
  #allocation2 [shape = 'f32[8,32]{1,0:T(8,128)}', space=vmem, size = 0x1000, scoped, tag = 'scratch operand']
  #allocation3 [shape = 'f32[8,32]{1,0:T(8,128)}', space=vmem, size = 0x1000, scoped, tag = 'scratch operand']
  %s0 = inlined_call_operand.vmem [shape: f32[8,32], index: 0, kind: input, shape index: {}]
  %s1 = inlined_call_operand.vmem [shape: f32[2,32,96], index: 1, kind: input, shape index: {}]
  %s2 = inlined_call_operand.vmem [shape: f32[2,1,96], index: 2, kind: input, shape index: {}]
  %s3 = inlined_call_operand.vmem [shape: f32[2,32,64], index: 3, kind: input, shape index: {}]
  %s4 = inlined_call_operand.vmem [shape: f32[2,1,64], index: 4, kind: input, shape index: {}]
  %s5 = inlined_call_operand.vmem [shape: f32[2,64,32], index: 5, kind: input, shape index: {}]
  %s6 = inlined_call_operand.vmem [shape: f32[2,1,32], index: 6, kind: input, shape index: {}]
  %s7 = inlined_call_operand.vmem [shape: f32[1,32], index: 7, kind: input, shape index: {}]
  %s8 = inlined_call_operand.vmem [shape: f32[1,32], index: 8, kind: input, shape index: {}]
  %s9 = inlined_call_operand.hbm [shape: f32[8,32], index: 9, kind: output, shape index: {}]
  %s10 = sld [smem:[#allocation0]]
  $region77: #{tpu_custom_call.1} parent=0
    _
  %s12 = ssub.s32 1, %s10
  %s13 = scalar_select 0, %s12, %s10
  $region1: #{tpu_custom_call.1} parent=0
    #allocation4 [shape = 'u8[4096]{0}', space=vmem, size = 0x1000, scoped, tag = 'output window, operand 0, single buffered']
    #allocation5 [shape = 's32[2]{0}', space=sflag, size = 0x8, scoped, tag = 'scoped memory for tpu_custom_call.1']
    %14 = vsyncpa [#allocation5], 0
    loop: start=0, step=1, limit=4
    $region2: #{tpu_custom_call.1} parent=1 // loop_pre_header
      _
    $region3: #{tpu_custom_call.1} parent=1 // loop_header
      %s16 = sphi 0, %s20
      %p17 = scmp.ge.s32.totalorder %s16, 4
      %s24 = sphi 0, %s24
      %s26 = sphi 0, %s24
      %s27 = sphi 0, %s26
      %s41 = sphi 0, %s27
      %s47 = sphi 0, %s49
      %s50 = sphi 0, %s47
      %s51 = sphi 0, %s50
      %s67 = sphi 0, %s51
      %s73 = sphi 0, %s75
      %s76 = sphi 0, %s73
      %s77 = sphi 0, %s76
      %s93 = sphi 0, %s77
      %s99 = sphi 0, %s101
      %s102 = sphi 0, %s99
      %s103 = sphi 0, %s102
      %s119 = sphi 0, %s103
      %s125 = sphi 0, %s127
      %s128 = sphi 0, %s125
      %s129 = sphi 0, %s128
      %s145 = sphi 0, %s129
      %s151 = sphi 0, %s153
      %s154 = sphi 0, %s151
      %s155 = sphi 0, %s154
      %s171 = sphi 0, %s155
      %s177 = sphi 0, %s179
      %s180 = sphi 0, %s177
      %s181 = sphi 0, %s180
      %s197 = sphi 0, %s181
      %s201 = sphi 0, %s201
      %s203 = sphi 0, %s201
      %s204 = sphi 0, %s203
      %s218 = sphi 0, %s204
      %s222 = sphi 0, %s222
      %s224 = sphi 0, %s222
      %s225 = sphi 0, %s224
      %s239 = sphi 0, %s225
      %s243 = sphi 0, %s243
      %s245 = sphi 0, %s243
      %s246 = sphi 0, %s245
      %s260 = sphi 0, %s246
    $region4: #{tpu_custom_call.1} parent=1 // loop_header_branch
      %19 = sbr.rel (%p17) target = $region8
    $region5: #{tpu_custom_call.1} parent=1 // loop_body
      %s21 = ssub.s32 %s16, 1
      %s22 = ssub.s32 %s16, 2
      %s23 = sadd.s32 %s16, 1
      %s25 = sadd.s32 %s24, 1
      %p28 = scmp.eq.s32.totalorder %s16, 1
      %p29 = scmp.ne.s32.totalorder %s24, %s26
      %p30 = scmp.eq.s32.totalorder %s16, 0
      %p31 = por %p29, %p30
      %p32 = scmp.ne.s32.totalorder %s24, %s26
      %p33 = scmp.eq.s32.totalorder %s21, 1
      %p34 = por %p32, %p33
      %p35 = scmp.ne.s32.totalorder %s26, %s27
      %p36 = scmp.eq.s32.totalorder %s21, 0
      %p37 = por %p35, %p36
      %p38 = scmp.ne.s32.totalorder %s26, %s27
      %p39 = scmp.eq.s32.totalorder %s22, 1
      %p40 = por %p38, %p39
      %p42 = scmp.ne.s32.totalorder %s27, %s41
      %p43 = scmp.eq.s32.totalorder %s22, 0
      %p44 = por %p42, %p43
      %s45 = ssub.s32 %s16, %s23
      %p46 = scmp.eq.s32.totalorder %s45, 0
      %s48 = sadd.s32 %s47, 1
      %s49 = scalar_select %p46, %s47, %s48
      %p52 = pneg %p46
      %p53 = scmp.eq.s32.totalorder %s16, 1
      %p54 = por %p52, %p53
      %p55 = scmp.ne.s32.totalorder %s47, %s50
      %p56 = scmp.eq.s32.totalorder %s16, 0
      %p57 = por %p55, %p56
      %p58 = scmp.ne.s32.totalorder %s47, %s50
      %p59 = scmp.eq.s32.totalorder %s21, 1
      %p60 = por %p58, %p59
      %p61 = scmp.ne.s32.totalorder %s50, %s51
      %p62 = scmp.eq.s32.totalorder %s21, 0
      %p63 = por %p61, %p62
      %p64 = scmp.ne.s32.totalorder %s50, %s51
      %p65 = scmp.eq.s32.totalorder %s22, 1
      %p66 = por %p64, %p65
      %p68 = scmp.ne.s32.totalorder %s51, %s67
      %p69 = scmp.eq.s32.totalorder %s22, 0
      %p70 = por %p68, %p69
      %s71 = ssub.s32 %s16, %s23
      %p72 = scmp.eq.s32.totalorder %s71, 0
      %s74 = sadd.s32 %s73, 1
      %s75 = scalar_select %p72, %s73, %s74
      %p78 = pneg %p72
      %p79 = scmp.eq.s32.totalorder %s16, 1
      %p80 = por %p78, %p79
      %p81 = scmp.ne.s32.totalorder %s73, %s76
      %p82 = scmp.eq.s32.totalorder %s16, 0
      %p83 = por %p81, %p82
      %p84 = scmp.ne.s32.totalorder %s73, %s76
      %p85 = scmp.eq.s32.totalorder %s21, 1
      %p86 = por %p84, %p85
      %p87 = scmp.ne.s32.totalorder %s76, %s77
      %p88 = scmp.eq.s32.totalorder %s21, 0
      %p89 = por %p87, %p88
      %p90 = scmp.ne.s32.totalorder %s76, %s77
      %p91 = scmp.eq.s32.totalorder %s22, 1
      %p92 = por %p90, %p91
      %p94 = scmp.ne.s32.totalorder %s77, %s93
      %p95 = scmp.eq.s32.totalorder %s22, 0
      %p96 = por %p94, %p95
      %s97 = ssub.s32 %s16, %s23
      %p98 = scmp.eq.s32.totalorder %s97, 0
      %s100 = sadd.s32 %s99, 1
      %s101 = scalar_select %p98, %s99, %s100
      %p104 = pneg %p98
      %p105 = scmp.eq.s32.totalorder %s16, 1
      %p106 = por %p104, %p105
      %p107 = scmp.ne.s32.totalorder %s99, %s102
      %p108 = scmp.eq.s32.totalorder %s16, 0
      %p109 = por %p107, %p108
      %p110 = scmp.ne.s32.totalorder %s99, %s102
      %p111 = scmp.eq.s32.totalorder %s21, 1
      %p112 = por %p110, %p111
      %p113 = scmp.ne.s32.totalorder %s102, %s103
      %p114 = scmp.eq.s32.totalorder %s21, 0
      %p115 = por %p113, %p114
      %p116 = scmp.ne.s32.totalorder %s102, %s103
      %p117 = scmp.eq.s32.totalorder %s22, 1
      %p118 = por %p116, %p117
      %p120 = scmp.ne.s32.totalorder %s103, %s119
      %p121 = scmp.eq.s32.totalorder %s22, 0
      %p122 = por %p120, %p121
      %s123 = ssub.s32 %s16, %s23
      %p124 = scmp.eq.s32.totalorder %s123, 0
      %s126 = sadd.s32 %s125, 1
      %s127 = scalar_select %p124, %s125, %s126
      %p130 = pneg %p124
      %p131 = scmp.eq.s32.totalorder %s16, 1
      %p132 = por %p130, %p131
      %p133 = scmp.ne.s32.totalorder %s125, %s128
      %p134 = scmp.eq.s32.totalorder %s16, 0
      %p135 = por %p133, %p134
      %p136 = scmp.ne.s32.totalorder %s125, %s128
      %p137 = scmp.eq.s32.totalorder %s21, 1
      %p138 = por %p136, %p137
      %p139 = scmp.ne.s32.totalorder %s128, %s129
      %p140 = scmp.eq.s32.totalorder %s21, 0
      %p141 = por %p139, %p140
      %p142 = scmp.ne.s32.totalorder %s128, %s129
      %p143 = scmp.eq.s32.totalorder %s22, 1
      %p144 = por %p142, %p143
      %p146 = scmp.ne.s32.totalorder %s129, %s145
      %p147 = scmp.eq.s32.totalorder %s22, 0
      %p148 = por %p146, %p147
      %s149 = ssub.s32 %s16, %s23
      %p150 = scmp.eq.s32.totalorder %s149, 0
      %s152 = sadd.s32 %s151, 1
      %s153 = scalar_select %p150, %s151, %s152
      %p156 = pneg %p150
      %p157 = scmp.eq.s32.totalorder %s16, 1
      %p158 = por %p156, %p157
      %p159 = scmp.ne.s32.totalorder %s151, %s154
      %p160 = scmp.eq.s32.totalorder %s16, 0
      %p161 = por %p159, %p160
      %p162 = scmp.ne.s32.totalorder %s151, %s154
      %p163 = scmp.eq.s32.totalorder %s21, 1
      %p164 = por %p162, %p163
      %p165 = scmp.ne.s32.totalorder %s154, %s155
      %p166 = scmp.eq.s32.totalorder %s21, 0
      %p167 = por %p165, %p166
      %p168 = scmp.ne.s32.totalorder %s154, %s155
      %p169 = scmp.eq.s32.totalorder %s22, 1
      %p170 = por %p168, %p169
      %p172 = scmp.ne.s32.totalorder %s155, %s171
      %p173 = scmp.eq.s32.totalorder %s22, 0
      %p174 = por %p172, %p173
      %s175 = ssub.s32 %s16, %s23
      %p176 = scmp.eq.s32.totalorder %s175, 0
      %s178 = sadd.s32 %s177, 1
      %s179 = scalar_select %p176, %s177, %s178
      %p182 = pneg %p176
      %p183 = scmp.eq.s32.totalorder %s16, 1
      %p184 = por %p182, %p183
      %p185 = scmp.ne.s32.totalorder %s177, %s180
      %p186 = scmp.eq.s32.totalorder %s16, 0
      %p187 = por %p185, %p186
      %p188 = scmp.ne.s32.totalorder %s177, %s180
      %p189 = scmp.eq.s32.totalorder %s21, 1
      %p190 = por %p188, %p189
      %p191 = scmp.ne.s32.totalorder %s180, %s181
      %p192 = scmp.eq.s32.totalorder %s21, 0
      %p193 = por %p191, %p192
      %p194 = scmp.ne.s32.totalorder %s180, %s181
      %p195 = scmp.eq.s32.totalorder %s22, 1
      %p196 = por %p194, %p195
      %p198 = scmp.ne.s32.totalorder %s181, %s197
      %p199 = scmp.eq.s32.totalorder %s22, 0
      %p200 = por %p198, %p199
      %s202 = sadd.s32 %s201, 1
      %p205 = scmp.eq.s32.totalorder %s16, 1
      %p206 = scmp.ne.s32.totalorder %s201, %s203
      %p207 = scmp.eq.s32.totalorder %s16, 0
      %p208 = por %p206, %p207
      %p209 = scmp.ne.s32.totalorder %s201, %s203
      %p210 = scmp.eq.s32.totalorder %s21, 1
      %p211 = por %p209, %p210
      %p212 = scmp.ne.s32.totalorder %s203, %s204
      %p213 = scmp.eq.s32.totalorder %s21, 0
      %p214 = por %p212, %p213
      %p215 = scmp.ne.s32.totalorder %s203, %s204
      %p216 = scmp.eq.s32.totalorder %s22, 1
      %p217 = por %p215, %p216
      %p219 = scmp.ne.s32.totalorder %s204, %s218
      %p220 = scmp.eq.s32.totalorder %s22, 0
      %p221 = por %p219, %p220
      %s223 = sadd.s32 %s222, 1
      %p226 = scmp.eq.s32.totalorder %s16, 1
      %p227 = scmp.ne.s32.totalorder %s222, %s224
      %p228 = scmp.eq.s32.totalorder %s16, 0
      %p229 = por %p227, %p228
      %p230 = scmp.ne.s32.totalorder %s222, %s224
      %p231 = scmp.eq.s32.totalorder %s21, 1
      %p232 = por %p230, %p231
      %p233 = scmp.ne.s32.totalorder %s224, %s225
      %p234 = scmp.eq.s32.totalorder %s21, 0
      %p235 = por %p233, %p234
      %p236 = scmp.ne.s32.totalorder %s224, %s225
      %p237 = scmp.eq.s32.totalorder %s22, 1
      %p238 = por %p236, %p237
      %p240 = scmp.ne.s32.totalorder %s225, %s239
      %p241 = scmp.eq.s32.totalorder %s22, 0
      %p242 = por %p240, %p241
      %s244 = sadd.s32 %s243, 1
      %p247 = scmp.eq.s32.totalorder %s16, 1
      %p248 = scmp.ne.s32.totalorder %s243, %s245
      %p249 = scmp.eq.s32.totalorder %s16, 0
      %p250 = por %p248, %p249
      %p251 = scmp.ne.s32.totalorder %s243, %s245
      %p252 = scmp.eq.s32.totalorder %s21, 1
      %p253 = por %p251, %p252
      %p254 = scmp.ne.s32.totalorder %s245, %s246
      %p255 = scmp.eq.s32.totalorder %s21, 0
      %p256 = por %p254, %p255
      %p257 = scmp.ne.s32.totalorder %s245, %s246
      %p258 = scmp.eq.s32.totalorder %s22, 1
      %p259 = por %p257, %p258
      %p261 = scmp.ne.s32.totalorder %s246, %s260
      %p262 = scmp.eq.s32.totalorder %s22, 0
      %p263 = por %p261, %p262
      %p264 = scmp.le.s32.totalorder 1, %s16
      %p265 = scmp.lt.s32.totalorder %s16, 3
      %p266 = pnand %p264, %p265
      %p267 = pneg %p266
      // Predicated region
      $region9: #{tpu_custom_call.1} parent=5 // pred_check
        _
      $region10: #{tpu_custom_call.1} parent=5 // pred_check_branch
        %269 = sbr.rel (%p266) target = $region12
      $region11: #{tpu_custom_call.1} parent=5 // pred_region
        %s270 = ssub.s32 %s16, 1
        // Predicated region
        $region13: #{tpu_custom_call.1} parent=11 // pred_check
          %p271 = pneg %p37
        $region14: #{tpu_custom_call.1} parent=11 // pred_check_branch
          %273 = sbr.rel (%p271) target = $region16
        $region15: #{tpu_custom_call.1} parent=11 // pred_region
          _
        $region16: #{tpu_custom_call.1} parent=11 // pred_fallthru
          _
        // Predicated region
        $region17: #{tpu_custom_call.1} parent=11 // pred_check
          %p274 = pneg %p214
        $region18: #{tpu_custom_call.1} parent=11 // pred_check_branch
          %276 = sbr.rel (%p274) target = $region20
        $region19: #{tpu_custom_call.1} parent=11 // pred_region
          _
        $region20: #{tpu_custom_call.1} parent=11 // pred_fallthru
          _
        // Predicated region
        $region21: #{tpu_custom_call.1} parent=11 // pred_check
          %p277 = pneg %p235
        $region22: #{tpu_custom_call.1} parent=11 // pred_check_branch
          %279 = sbr.rel (%p277) target = $region24
        $region23: #{tpu_custom_call.1} parent=11 // pred_region
          _
        $region24: #{tpu_custom_call.1} parent=11 // pred_fallthru
          _
      $region12: #{tpu_custom_call.1} parent=5 // pred_fallthru
        _
      %p280 = scmp.lt.s32.totalorder %s16, 2
      // Predicated region
      $region25: #{tpu_custom_call.1} parent=5 // pred_check
        %p281 = pneg %p280
      $region26: #{tpu_custom_call.1} parent=5 // pred_check_branch
        %283 = sbr.rel (%p281) target = $region28
      $region27: #{tpu_custom_call.1} parent=5 // pred_region
        // Predicated region
        $region29: #{tpu_custom_call.1} parent=27 // pred_check
          %p284 = pneg %p57
        $region30: #{tpu_custom_call.1} parent=27 // pred_check_branch
          %286 = sbr.rel (%p284) target = $region32
        $region31: #{tpu_custom_call.1} parent=27 // pred_region
          %p287 = scmp.lt.s32.totalorder %s16, 1
          %s288 = scalar_select %p287, %s16, 1
          %s289 = smul.addr %s288, 4
          %s290 = smul.addr %s289, 8
          %s291 = scalar_lea.vmem %s1, %s290
        $region32: #{tpu_custom_call.1} parent=27 // pred_fallthru
          _
        // Predicated region
        $region33: #{tpu_custom_call.1} parent=27 // pred_check
          %p292 = pneg %p83
        $region34: #{tpu_custom_call.1} parent=27 // pred_check_branch
          %294 = sbr.rel (%p292) target = $region36
        $region35: #{tpu_custom_call.1} parent=27 // pred_region
          %p295 = scmp.lt.s32.totalorder %s16, 1
          %s296 = scalar_select %p295, %s16, 1
          %s297 = scalar_lea.vmem %s2, %s296
        $region36: #{tpu_custom_call.1} parent=27 // pred_fallthru
          _
        // Predicated region
        $region37: #{tpu_custom_call.1} parent=27 // pred_check
          %p298 = pneg %p109
        $region38: #{tpu_custom_call.1} parent=27 // pred_check_branch
          %300 = sbr.rel (%p298) target = $region40
        $region39: #{tpu_custom_call.1} parent=27 // pred_region
          %p301 = scmp.lt.s32.totalorder %s16, 1
          %s302 = scalar_select %p301, %s16, 1
          %s303 = smul.addr %s302, 4
          %s304 = smul.addr %s303, 8
          %s305 = scalar_lea.vmem %s3, %s304
        $region40: #{tpu_custom_call.1} parent=27 // pred_fallthru
          _
        // Predicated region
        $region41: #{tpu_custom_call.1} parent=27 // pred_check
          %p306 = pneg %p135
        $region42: #{tpu_custom_call.1} parent=27 // pred_check_branch
          %308 = sbr.rel (%p306) target = $region44
        $region43: #{tpu_custom_call.1} parent=27 // pred_region
          %p309 = scmp.lt.s32.totalorder %s16, 1
          %s310 = scalar_select %p309, %s16, 1
          %s311 = scalar_lea.vmem %s4, %s310
        $region44: #{tpu_custom_call.1} parent=27 // pred_fallthru
          _
        // Predicated region
        $region45: #{tpu_custom_call.1} parent=27 // pred_check
          %p312 = pneg %p161
        $region46: #{tpu_custom_call.1} parent=27 // pred_check_branch
          %314 = sbr.rel (%p312) target = $region48
        $region47: #{tpu_custom_call.1} parent=27 // pred_region
          %p315 = scmp.lt.s32.totalorder %s16, 1
          %s316 = scalar_select %p315, %s16, 1
          %s317 = smul.addr %s316, 8
          %s318 = smul.addr %s317, 8
          %s319 = scalar_lea.vmem %s5, %s318
        $region48: #{tpu_custom_call.1} parent=27 // pred_fallthru
          _
        // Predicated region
        $region49: #{tpu_custom_call.1} parent=27 // pred_check
          %p320 = pneg %p187
        $region50: #{tpu_custom_call.1} parent=27 // pred_check_branch
          %322 = sbr.rel (%p320) target = $region52
        $region51: #{tpu_custom_call.1} parent=27 // pred_region
          %p323 = scmp.lt.s32.totalorder %s16, 1
          %s324 = scalar_select %p323, %s16, 1
          %s325 = scalar_lea.vmem %s6, %s324
        $region52: #{tpu_custom_call.1} parent=27 // pred_fallthru
          _
      $region28: #{tpu_custom_call.1} parent=5 // pred_fallthru
        _
      %p326 = scmp.le.s32.totalorder 1, %s16
      %p327 = scmp.lt.s32.totalorder %s16, 3
      %p328 = pnand %p326, %p327
      %p329 = pneg %p328
      // Predicated region
      $region53: #{tpu_custom_call.1} parent=5 // pred_check
        _
      $region54: #{tpu_custom_call.1} parent=5 // pred_check_branch
        %331 = sbr.rel (%p328) target = $region56
      $region55: #{tpu_custom_call.1} parent=5 // pred_region
        %s332 = ssub.s32 %s16, 1
        %p333 = pneg %p37
        %p334 = pneg %p34
        %p335 = scmp.lt.s32.totalorder %s21, 1
        %s336 = scalar_select %p335, %s21, 1
        %s337 = smul.addr %s336, 4
        %s338 = smul.addr %s337, 8
        %s339 = scalar_lea.vmem %s1, %s338
        %p340 = pneg %p63
        %p341 = pneg %p60
        %p342 = scmp.lt.s32.totalorder %s21, 1
        %s343 = scalar_select %p342, %s21, 1
        %s344 = scalar_lea.vmem %s2, %s343
        %p345 = pneg %p89
        %p346 = pneg %p86
        %p347 = scmp.lt.s32.totalorder %s21, 1
        %s348 = scalar_select %p347, %s21, 1
        %s349 = smul.addr %s348, 4
        %s350 = smul.addr %s349, 8
        %s351 = scalar_lea.vmem %s3, %s350
        %p352 = pneg %p115
        %p353 = pneg %p112
        %p354 = scmp.lt.s32.totalorder %s21, 1
        %s355 = scalar_select %p354, %s21, 1
        %s356 = scalar_lea.vmem %s4, %s355
        %p357 = pneg %p141
        %p358 = pneg %p138
        %p359 = scmp.lt.s32.totalorder %s21, 1
        %s360 = scalar_select %p359, %s21, 1
        %s361 = smul.addr %s360, 8
        %s362 = smul.addr %s361, 8
        %s363 = scalar_lea.vmem %s5, %s362
        %p364 = pneg %p167
        %p365 = pneg %p164
        %p366 = scmp.lt.s32.totalorder %s21, 1
        %s367 = scalar_select %p366, %s21, 1
        %s368 = scalar_lea.vmem %s6, %s367
        %p369 = pneg %p193
        %p370 = pneg %p190
        %p371 = pneg %p214
        %p372 = pneg %p211
        %p373 = pneg %p235
        %p374 = pneg %p232
        %p375 = pneg %p256
        %p376 = pneg %p253
        %p377 = scmp.lt.s32.totalorder %s21, 1
        %s378 = scalar_select %p377, %s21, 1
        %s379 = smul.addr %s378, 4
        %s380 = smul.addr %s379, 8
        %s381 = scalar_lea.vmem %s1, %s380
        %p382 = scmp.lt.s32.totalorder %s21, 1
        %s383 = scalar_select %p382, %s21, 1
        %s384 = scalar_lea.vmem %s2, %s383
        %p385 = scmp.lt.s32.totalorder %s21, 1
        %s386 = scalar_select %p385, %s21, 1
        %s387 = smul.addr %s386, 4
        %s388 = smul.addr %s387, 8
        %s389 = scalar_lea.vmem %s3, %s388
        %p390 = scmp.lt.s32.totalorder %s21, 1
        %s391 = scalar_select %p390, %s21, 1
        %s392 = scalar_lea.vmem %s4, %s391
        %p393 = scmp.lt.s32.totalorder %s21, 1
        %s394 = scalar_select %p393, %s21, 1
        %s395 = smul.addr %s394, 8
        %s396 = smul.addr %s395, 8
        %s397 = scalar_lea.vmem %s5, %s396
        %p398 = scmp.lt.s32.totalorder %s21, 1
        %s399 = scalar_select %p398, %s21, 1
        %s400 = scalar_lea.vmem %s6, %s399
        %p401 = scmp.eq.s32.totalorder %s21, 0
        // Predicated region
        $region57: #{tpu_custom_call.1} parent=55 // pred_check
          %p402 = pneg %p401
        $region58: #{tpu_custom_call.1} parent=55 // pred_check_branch
          %404 = sbr.rel (%p402) target = $region60
        $region59: #{tpu_custom_call.1} parent=55 // pred_region
          %v405 = vld [vmem:[%s0] sm:$0xff]
          %vm406 = vcmask 261120
          %407 = vst.msk [vmem:[#allocation2] sm:$0xff] %vm406, %v405
        $region60: #{tpu_custom_call.1} parent=55 // pred_fallthru
          _
        %v408 = vld [vmem:[#allocation2] sm:$0xff]
        %v409 = vld [vmem:[%s381] sm:$0xff]
        %v410 = vld [vmem:[%s381 + $0x8] sm:$0xff]
        %v411 = vld [vmem:[%s381 + $0x10] sm:$0xff]
        %v412 = vld [vmem:[%s381 + $0x18] sm:$0xff]
        %v413 = vld [vmem:[%s384] sm:$0x1]
        %v415 = vlaneseq
        %v416 = vshrl.u32 %v415, 7
        %v417 = vsub.s32 0, %v416
        %v418 = vrot.slane %v413, %v417
        %vm420 = vcmask 261120
        %v422 = vsel %vm420, %v408, 0
        %424 = vmatprep.subr.mxu0 0.0
        %425 = vmatpush1.msra.mxu0 0.0
        %426 = vmatprep.subr.mxu0 0.0
        %427 = vmatpush1.msra.mxu0 0.0
        %428 = vmatprep.subr.mxu0 0.0
        %429 = vmatpush1.msra.mxu0 0.0
        %430 = vmatprep.subr.mxu0 0.0
        %431 = vmatpush1.msra.mxu0 0.0
        %432 = vmatprep.subr.mxu0 0.0
        %433 = vmatpush1.msra.mxu0 0.0
        %434 = vmatprep.subr.mxu0 0.0
        %435 = vmatpush1.msra.mxu0 0.0
        %436 = vmatprep.subr.mxu0 0.0
        %437 = vmatpush1.msra.mxu0 0.0
        %438 = vmatprep.subr.mxu0 0.0
        %439 = vmatpush1.msra.mxu0 0.0
        %440 = vmatprep.subr.mxu0 0.0
        %441 = vmatpush1.msra.mxu0 0.0
        %442 = vmatprep.subr.mxu0 0.0
        %443 = vmatpush1.msra.mxu0 0.0
        %444 = vmatprep.subr.mxu0 0.0
        %445 = vmatpush1.msra.mxu0 0.0
        %446 = vmatprep.subr.mxu0 0.0
        %447 = vmatpush1.msra.mxu0 0.0
        %448 = vmatprep.subr.mxu0 0.0
        %449 = vmatpush1.msra.mxu0 %v412
        %450 = vmatprep.subr.mxu0 0.0
        %451 = vmatpush1.msra.mxu0 %v411
        %452 = vmatprep.subr.mxu0 0.0
        %453 = vmatpush1.msra.mxu0 %v410
        %454 = vmatprep.subr.mxu0 0.0
        %455 = vmatpush1.msra.mxu0 %v409
        %456 = vmatprep.subr.mxu0 0.0
        %457 = vmatpush2.msra.mxu0 0.0
        %458 = vmatprep.subr.mxu0 0.0
        %459 = vmatpush2.msra.mxu0 0.0
        %460 = vmatprep.subr.mxu0 0.0
        %461 = vmatpush2.msra.mxu0 0.0
        %462 = vmatprep.subr.mxu0 0.0
        %463 = vmatpush2.msra.mxu0 0.0
        %464 = vmatprep.subr.mxu0 0.0
        %465 = vmatpush2.msra.mxu0 0.0
        %466 = vmatprep.subr.mxu0 0.0
        %467 = vmatpush2.msra.mxu0 0.0
        %468 = vmatprep.subr.mxu0 0.0
        %469 = vmatpush2.msra.mxu0 0.0
        %470 = vmatprep.subr.mxu0 0.0
        %471 = vmatpush2.msra.mxu0 0.0
        %472 = vmatprep.subr.mxu0 0.0
        %473 = vmatpush2.msra.mxu0 0.0
        %474 = vmatprep.subr.mxu0 0.0
        %475 = vmatpush2.msra.mxu0 0.0
        %476 = vmatprep.subr.mxu0 0.0
        %477 = vmatpush2.msra.mxu0 0.0
        %478 = vmatprep.subr.mxu0 0.0
        %479 = vmatpush2.msra.mxu0 0.0
        %480 = vmatprep.subr.mxu0 0.0
        %481 = vmatpush2.msra.mxu0 0.0
        %482 = vmatprep.subr.mxu0 0.0
        %483 = vmatpush2.msra.mxu0 0.0
        %484 = vmatprep.subr.mxu0 0.0
        %485 = vmatpush2.msra.mxu0 0.0
        %486 = vmatprep.subr.mxu0 0.0
        %487 = vmatpush2.msra.mxu0 0.0
        %488 = vmatprep.mubr.f32.mxu0 0.0
        %489 = vmatmul.mubr.f32.gmra.mxu0 %v422
        %v490 = vpop.f32.mrf.mxu0
        %v491 = vadd.f32 %v418, %v490
        %v492 = vpop.f32.mrf.mxu0
        %493 = vdwg.mxu0
        %495 = vrot.lane.b32.xlu0 %v491, 96
        %v496 = vpop.permute.xlu0 %495
        %vm497 = vcmask 130048
        %v498 = vsel %vm497, %v491, 0
        %v500 = vsel %vm497, %v496, 0
        %502 = vmatprep.subr.mxu0 0.0
        %503 = vmatpush1.xpose.msra.mxu0 0.0
        %504 = vmatprep.subr.mxu0 0.0
        %505 = vmatpush1.xpose.msra.mxu0 0.0
        %506 = vmatprep.subr.mxu0 0.0
        %507 = vmatpush1.xpose.msra.mxu0 0.0
        %508 = vmatprep.subr.mxu0 0.0
        %509 = vmatpush1.xpose.msra.mxu0 0.0
        %510 = vmatprep.subr.mxu0 0.0
        %511 = vmatpush1.xpose.msra.mxu0 0.0
        %512 = vmatprep.subr.mxu0 0.0
        %513 = vmatpush1.xpose.msra.mxu0 0.0
        %514 = vmatprep.subr.mxu0 0.0
        %515 = vmatpush1.xpose.msra.mxu0 0.0
        %516 = vmatprep.subr.mxu0 0.0
        %517 = vmatpush1.xpose.msra.mxu0 0.0
        %518 = vmatprep.subr.mxu0 0.0
        %519 = vmatpush1.xpose.msra.mxu0 0.0
        %520 = vmatprep.subr.mxu0 0.0
        %521 = vmatpush1.xpose.msra.mxu0 0.0
        %522 = vmatprep.subr.mxu0 0.0
        %523 = vmatpush1.xpose.msra.mxu0 0.0
        %524 = vmatprep.subr.mxu0 0.0
        %525 = vmatpush1.xpose.msra.mxu0 0.0
        %526 = vmatprep.subr.mxu0 0.0
        %527 = vmatpush1.xpose.msra.mxu0 0.0
        %528 = vmatprep.subr.mxu0 0.0
        %529 = vmatpush1.xpose.msra.mxu0 0.0
        %530 = vmatprep.subr.mxu0 0.0
        %531 = vmatpush1.xpose.msra.mxu0 0.0
        %532 = vmatprep.subr.mxu0 0.0
        %533 = vmatpush1.xpose.msra.mxu0 %v500
        %534 = vmatprep.subr.mxu0 0.0
        %535 = vmatpush2.xpose.msra.mxu0 0.0
        %536 = vmatprep.subr.mxu0 0.0
        %537 = vmatpush2.xpose.msra.mxu0 0.0
        %538 = vmatprep.subr.mxu0 0.0
        %539 = vmatpush2.xpose.msra.mxu0 0.0
        %540 = vmatprep.subr.mxu0 0.0
        %541 = vmatpush2.xpose.msra.mxu0 0.0
        %542 = vmatprep.subr.mxu0 0.0
        %543 = vmatpush2.xpose.msra.mxu0 0.0
        %544 = vmatprep.subr.mxu0 0.0
        %545 = vmatpush2.xpose.msra.mxu0 0.0
        %546 = vmatprep.subr.mxu0 0.0
        %547 = vmatpush2.xpose.msra.mxu0 0.0
        %548 = vmatprep.subr.mxu0 0.0
        %549 = vmatpush2.xpose.msra.mxu0 0.0
        %550 = vmatprep.subr.mxu0 0.0
        %551 = vmatpush2.xpose.msra.mxu0 0.0
        %552 = vmatprep.subr.mxu0 0.0
        %553 = vmatpush2.xpose.msra.mxu0 0.0
        %554 = vmatprep.subr.mxu0 0.0
        %555 = vmatpush2.xpose.msra.mxu0 0.0
        %556 = vmatprep.subr.mxu0 0.0
        %557 = vmatpush2.xpose.msra.mxu0 0.0
        %558 = vmatprep.subr.mxu0 0.0
        %559 = vmatpush2.xpose.msra.mxu0 0.0
        %560 = vmatprep.subr.mxu0 0.0
        %561 = vmatpush2.xpose.msra.mxu0 0.0
        %562 = vmatprep.subr.mxu0 0.0
        %563 = vmatpush2.xpose.msra.mxu0 0.0
        %564 = vmatprep.subr.mxu0 0.0
        %565 = vmatpush2.xpose.msra.mxu0 0.0
        %566 = vmatprep.mubr.f32.mxu0 0.0
        %567 = vmatmul.mubr.f32.gmra.mxu0 %v498
        %v568 = vpop.f32.mrf.mxu0
        %v569 = vadd.f32 0.0, %v568
        %v570 = vpop.f32.mrf.mxu0
        %571 = vdwg.mxu0
        %v572 = vmul.f32 %v569, 0.03125
        %vm573 = vcmask 64512
        %v574 = vsel %vm573, %v572, -inf
        %575 = vmax.xlane.f32.xlu0 %v574
        %v576 = vpop.xlane.xlu0 %575
        %v577 = vsub.f32 %v572, %v576
        %v578 = vmul.f32 %v577, 1.442695
        %v579 = vpow.pop %v578
        %v580 = vsel %vm573, %v579, 0.0
        %581 = vadd.xlane.f32.xlu0 %v580
        %v582 = vpop.xlane.xlu0 %581
        %v583 = vrcp.pop %v582
        %v584 = vmul.f32 %v579, %v583
        %585 = vrot.lane.b32.xlu0 %v491, 64
        %v586 = vpop.permute.xlu0 %585
        %v589 = vsel %vm573, %v584, 0
        %591 = vmatprep.subr.mxu0 0.0
        %592 = vmatpush1.msra.mxu0 0.0
        %593 = vmatprep.subr.mxu0 0.0
        %594 = vmatpush1.msra.mxu0 0.0
        %595 = vmatprep.subr.mxu0 0.0
        %596 = vmatpush1.msra.mxu0 0.0
        %597 = vmatprep.subr.mxu0 0.0
        %598 = vmatpush1.msra.mxu0 0.0
        %599 = vmatprep.subr.mxu0 0.0
        %600 = vmatpush1.msra.mxu0 0.0
        %601 = vmatprep.subr.mxu0 0.0
        %602 = vmatpush1.msra.mxu0 0.0
        %603 = vmatprep.subr.mxu0 0.0
        %604 = vmatpush1.msra.mxu0 0.0
        %605 = vmatprep.subr.mxu0 0.0
        %606 = vmatpush1.msra.mxu0 0.0
        %607 = vmatprep.subr.mxu0 0.0
        %608 = vmatpush1.msra.mxu0 0.0
        %609 = vmatprep.subr.mxu0 0.0
        %610 = vmatpush1.msra.mxu0 0.0
        %611 = vmatprep.subr.mxu0 0.0
        %612 = vmatpush1.msra.mxu0 0.0
        %613 = vmatprep.subr.mxu0 0.0
        %614 = vmatpush1.msra.mxu0 0.0
        %615 = vmatprep.subr.mxu0 0.0
        %616 = vmatpush1.msra.mxu0 0.0
        %617 = vmatprep.subr.mxu0 0.0
        %618 = vmatpush1.msra.mxu0 0.0
        %619 = vmatprep.subr.mxu0 0.0
        %620 = vmatpush1.msra.mxu0 0.0
        %621 = vmatprep.subr.mxu0 0.0
        %622 = vmatpush1.msra.mxu0 %v586
        %623 = vmatprep.subr.mxu0 0.0
        %624 = vmatpush2.msra.mxu0 0.0
        %625 = vmatprep.subr.mxu0 0.0
        %626 = vmatpush2.msra.mxu0 0.0
        %627 = vmatprep.subr.mxu0 0.0
        %628 = vmatpush2.msra.mxu0 0.0
        %629 = vmatprep.subr.mxu0 0.0
        %630 = vmatpush2.msra.mxu0 0.0
        %631 = vmatprep.subr.mxu0 0.0
        %632 = vmatpush2.msra.mxu0 0.0
        %633 = vmatprep.subr.mxu0 0.0
        %634 = vmatpush2.msra.mxu0 0.0
        %635 = vmatprep.subr.mxu0 0.0
        %636 = vmatpush2.msra.mxu0 0.0
        %637 = vmatprep.subr.mxu0 0.0
        %638 = vmatpush2.msra.mxu0 0.0
        %639 = vmatprep.subr.mxu0 0.0
        %640 = vmatpush2.msra.mxu0 0.0
        %641 = vmatprep.subr.mxu0 0.0
        %642 = vmatpush2.msra.mxu0 0.0
        %643 = vmatprep.subr.mxu0 0.0
        %644 = vmatpush2.msra.mxu0 0.0
        %645 = vmatprep.subr.mxu0 0.0
        %646 = vmatpush2.msra.mxu0 0.0
        %647 = vmatprep.subr.mxu0 0.0
        %648 = vmatpush2.msra.mxu0 0.0
        %649 = vmatprep.subr.mxu0 0.0
        %650 = vmatpush2.msra.mxu0 0.0
        %651 = vmatprep.subr.mxu0 0.0
        %652 = vmatpush2.msra.mxu0 0.0
        %653 = vmatprep.subr.mxu0 0.0
        %654 = vmatpush2.msra.mxu0 0.0
        %655 = vmatprep.mubr.f32.mxu0 0.0
        %656 = vmatmul.mubr.f32.gmra.mxu0 %v589
        %v657 = vpop.f32.mrf.mxu0
        %v658 = vadd.f32 0.0, %v657
        %v659 = vpop.f32.mrf.mxu0
        %660 = vdwg.mxu0
        %661 = vst.msk [vmem:[#allocation3] sm:$0xff] %vm497, %v658
        %662 = vrot.lane.b32.xlu0 %v491, 112
        %v663 = vpop.permute.xlu0 %662
        %664 = vrot.lane.b32.xlu0 %v491, 80
        %v665 = vpop.permute.xlu0 %664
        %v666 = vsel %vm497, %v663, 0
        %v668 = vsel %vm497, %v665, 0
        %670 = vmatprep.subr.mxu0 0.0
        %671 = vmatpush1.xpose.msra.mxu0 0.0
        %672 = vmatprep.subr.mxu0 0.0
        %673 = vmatpush1.xpose.msra.mxu0 0.0
        %674 = vmatprep.subr.mxu0 0.0
        %675 = vmatpush1.xpose.msra.mxu0 0.0
        %676 = vmatprep.subr.mxu0 0.0
        %677 = vmatpush1.xpose.msra.mxu0 0.0
        %678 = vmatprep.subr.mxu0 0.0
        %679 = vmatpush1.xpose.msra.mxu0 0.0
        %680 = vmatprep.subr.mxu0 0.0
        %681 = vmatpush1.xpose.msra.mxu0 0.0
        %682 = vmatprep.subr.mxu0 0.0
        %683 = vmatpush1.xpose.msra.mxu0 0.0
        %684 = vmatprep.subr.mxu0 0.0
        %685 = vmatpush1.xpose.msra.mxu0 0.0
        %686 = vmatprep.subr.mxu0 0.0
        %687 = vmatpush1.xpose.msra.mxu0 0.0
        %688 = vmatprep.subr.mxu0 0.0
        %689 = vmatpush1.xpose.msra.mxu0 0.0
        %690 = vmatprep.subr.mxu0 0.0
        %691 = vmatpush1.xpose.msra.mxu0 0.0
        %692 = vmatprep.subr.mxu0 0.0
        %693 = vmatpush1.xpose.msra.mxu0 0.0
        %694 = vmatprep.subr.mxu0 0.0
        %695 = vmatpush1.xpose.msra.mxu0 0.0
        %696 = vmatprep.subr.mxu0 0.0
        %697 = vmatpush1.xpose.msra.mxu0 0.0
        %698 = vmatprep.subr.mxu0 0.0
        %699 = vmatpush1.xpose.msra.mxu0 0.0
        %700 = vmatprep.subr.mxu0 0.0
        %701 = vmatpush1.xpose.msra.mxu0 %v668
        %702 = vmatprep.subr.mxu0 0.0
        %703 = vmatpush2.xpose.msra.mxu0 0.0
        %704 = vmatprep.subr.mxu0 0.0
        %705 = vmatpush2.xpose.msra.mxu0 0.0
        %706 = vmatprep.subr.mxu0 0.0
        %707 = vmatpush2.xpose.msra.mxu0 0.0
        %708 = vmatprep.subr.mxu0 0.0
        %709 = vmatpush2.xpose.msra.mxu0 0.0
        %710 = vmatprep.subr.mxu0 0.0
        %711 = vmatpush2.xpose.msra.mxu0 0.0
        %712 = vmatprep.subr.mxu0 0.0
        %713 = vmatpush2.xpose.msra.mxu0 0.0
        %714 = vmatprep.subr.mxu0 0.0
        %715 = vmatpush2.xpose.msra.mxu0 0.0
        %716 = vmatprep.subr.mxu0 0.0
        %717 = vmatpush2.xpose.msra.mxu0 0.0
        %718 = vmatprep.subr.mxu0 0.0
        %719 = vmatpush2.xpose.msra.mxu0 0.0
        %720 = vmatprep.subr.mxu0 0.0
        %721 = vmatpush2.xpose.msra.mxu0 0.0
        %722 = vmatprep.subr.mxu0 0.0
        %723 = vmatpush2.xpose.msra.mxu0 0.0
        %724 = vmatprep.subr.mxu0 0.0
        %725 = vmatpush2.xpose.msra.mxu0 0.0
        %726 = vmatprep.subr.mxu0 0.0
        %727 = vmatpush2.xpose.msra.mxu0 0.0
        %728 = vmatprep.subr.mxu0 0.0
        %729 = vmatpush2.xpose.msra.mxu0 0.0
        %730 = vmatprep.subr.mxu0 0.0
        %731 = vmatpush2.xpose.msra.mxu0 0.0
        %732 = vmatprep.subr.mxu0 0.0
        %733 = vmatpush2.xpose.msra.mxu0 0.0
        %734 = vmatprep.mubr.f32.mxu0 0.0
        %735 = vmatmul.mubr.f32.gmra.mxu0 %v666
        %v736 = vpop.f32.mrf.mxu0
        %v737 = vadd.f32 0.0, %v736
        %v738 = vpop.f32.mrf.mxu0
        %739 = vdwg.mxu0
        %v740 = vmul.f32 %v737, 0.03125
        %v741 = vsel %vm573, %v740, -inf
        %742 = vmax.xlane.f32.xlu0 %v741
        %v743 = vpop.xlane.xlu0 %742
        %v744 = vsub.f32 %v740, %v743
        %v745 = vmul.f32 %v744, 1.442695
        %v746 = vpow.pop %v745
        %v747 = vsel %vm573, %v746, 0.0
        %748 = vadd.xlane.f32.xlu0 %v747
        %v749 = vpop.xlane.xlu0 %748
        %v750 = vrcp.pop %v749
        %v751 = vmul.f32 %v746, %v750
        %752 = vrot.lane.b32.xlu0 %v491, 48
        %v753 = vpop.permute.xlu0 %752
        %v756 = vsel %vm573, %v751, 0
        %758 = vmatprep.subr.mxu0 0.0
        %759 = vmatpush1.msra.mxu0 0.0
        %760 = vmatprep.subr.mxu0 0.0
        %761 = vmatpush1.msra.mxu0 0.0
        %762 = vmatprep.subr.mxu0 0.0
        %763 = vmatpush1.msra.mxu0 0.0
        %764 = vmatprep.subr.mxu0 0.0
        %765 = vmatpush1.msra.mxu0 0.0
        %766 = vmatprep.subr.mxu0 0.0
        %767 = vmatpush1.msra.mxu0 0.0
        %768 = vmatprep.subr.mxu0 0.0
        %769 = vmatpush1.msra.mxu0 0.0
        %770 = vmatprep.subr.mxu0 0.0
        %771 = vmatpush1.msra.mxu0 0.0
        %772 = vmatprep.subr.mxu0 0.0
        %773 = vmatpush1.msra.mxu0 0.0
        %774 = vmatprep.subr.mxu0 0.0
        %775 = vmatpush1.msra.mxu0 0.0
        %776 = vmatprep.subr.mxu0 0.0
        %777 = vmatpush1.msra.mxu0 0.0
        %778 = vmatprep.subr.mxu0 0.0
        %779 = vmatpush1.msra.mxu0 0.0
        %780 = vmatprep.subr.mxu0 0.0
        %781 = vmatpush1.msra.mxu0 0.0
        %782 = vmatprep.subr.mxu0 0.0
        %783 = vmatpush1.msra.mxu0 0.0
        %784 = vmatprep.subr.mxu0 0.0
        %785 = vmatpush1.msra.mxu0 0.0
        %786 = vmatprep.subr.mxu0 0.0
        %787 = vmatpush1.msra.mxu0 0.0
        %788 = vmatprep.subr.mxu0 0.0
        %789 = vmatpush1.msra.mxu0 %v753
        %790 = vmatprep.subr.mxu0 0.0
        %791 = vmatpush2.msra.mxu0 0.0
        %792 = vmatprep.subr.mxu0 0.0
        %793 = vmatpush2.msra.mxu0 0.0
        %794 = vmatprep.subr.mxu0 0.0
        %795 = vmatpush2.msra.mxu0 0.0
        %796 = vmatprep.subr.mxu0 0.0
        %797 = vmatpush2.msra.mxu0 0.0
        %798 = vmatprep.subr.mxu0 0.0
        %799 = vmatpush2.msra.mxu0 0.0
        %800 = vmatprep.subr.mxu0 0.0
        %801 = vmatpush2.msra.mxu0 0.0
        %802 = vmatprep.subr.mxu0 0.0
        %803 = vmatpush2.msra.mxu0 0.0
        %804 = vmatprep.subr.mxu0 0.0
        %805 = vmatpush2.msra.mxu0 0.0
        %806 = vmatprep.subr.mxu0 0.0
        %807 = vmatpush2.msra.mxu0 0.0
        %808 = vmatprep.subr.mxu0 0.0
        %809 = vmatpush2.msra.mxu0 0.0
        %810 = vmatprep.subr.mxu0 0.0
        %811 = vmatpush2.msra.mxu0 0.0
        %812 = vmatprep.subr.mxu0 0.0
        %813 = vmatpush2.msra.mxu0 0.0
        %814 = vmatprep.subr.mxu0 0.0
        %815 = vmatpush2.msra.mxu0 0.0
        %816 = vmatprep.subr.mxu0 0.0
        %817 = vmatpush2.msra.mxu0 0.0
        %818 = vmatprep.subr.mxu0 0.0
        %819 = vmatpush2.msra.mxu0 0.0
        %820 = vmatprep.subr.mxu0 0.0
        %821 = vmatpush2.msra.mxu0 0.0
        %822 = vmatprep.mubr.f32.mxu0 0.0
        %823 = vmatmul.mubr.f32.gmra.mxu0 %v756
        %v824 = vpop.f32.mrf.mxu0
        %v825 = vadd.f32 0.0, %v824
        %v826 = vpop.f32.mrf.mxu0
        %827 = vdwg.mxu0
        %829 = vrot.lane.b32.xlu0 %v825, 16
        %v830 = vpop.permute.xlu0 %829
        %vm832 = vcmask 261248
        %833 = vst.msk [vmem:[#allocation3] sm:$0xff] %vm832, %v830
        %v834 = vld [vmem:[%s7] sm:$0x1]
        %v835 = vld [vmem:[%s8] sm:$0x1]
        %v836 = vld [vmem:[#allocation3] sm:$0xff]
        %v837 = vadd.f32 %v408, %v836
        %v838 = vsel %vm420, %v837, 0.0
        %839 = vadd.xlane.f32.xlu0 %v838
        %v840 = vpop.xlane.xlu0 %839
        %v841 = vrcp.pop 32.0
        %v842 = vmul.f32 %v840, %v841
        %v843 = vsub.f32 %v837, %v842
        %v844 = vmul.f32 %v843, %v843
        %v845 = vsel %vm420, %v844, 0.0
        %846 = vadd.xlane.f32.xlu0 %v845
        %v847 = vpop.xlane.xlu0 %846
        %v848 = vmul.f32 %v847, %v841
        %v849 = vadd.f32 %v848, 1e-05
        %v850 = vrsqrt.pop %v849
        %v851 = vmul.f32 %v843, %v850
        %v853 = vlaneseq
        %v854 = vshrl.u32 %v853, 7
        %v855 = vsub.s32 0, %v854
        %v856 = vrot.slane %v834, %v855
        %v858 = vmul.f32 %v851, %v856
        %v860 = vlaneseq
        %v861 = vshrl.u32 %v860, 7
        %v862 = vsub.s32 0, %v861
        %v863 = vrot.slane %v835, %v862
        %v865 = vadd.f32 %v858, %v863
        %v866 = vld [vmem:[%s389] sm:$0xff]
        %v867 = vld [vmem:[%s389 + $0x8] sm:$0xff]
        %v868 = vld [vmem:[%s389 + $0x10] sm:$0xff]
        %v869 = vld [vmem:[%s389 + $0x18] sm:$0xff]
        %v870 = vld [vmem:[%s392] sm:$0x1]
        %v872 = vlaneseq
        %v873 = vshrl.u32 %v872, 7
        %v874 = vsub.s32 0, %v873
        %v875 = vrot.slane %v870, %v874
        %v878 = vsel %vm420, %v865, 0
        %880 = vmatprep.subr.mxu0 0.0
        %881 = vmatpush1.msra.mxu0 0.0
        %882 = vmatprep.subr.mxu0 0.0
        %883 = vmatpush1.msra.mxu0 0.0
        %884 = vmatprep.subr.mxu0 0.0
        %885 = vmatpush1.msra.mxu0 0.0
        %886 = vmatprep.subr.mxu0 0.0
        %887 = vmatpush1.msra.mxu0 0.0
        %888 = vmatprep.subr.mxu0 0.0
        %889 = vmatpush1.msra.mxu0 0.0
        %890 = vmatprep.subr.mxu0 0.0
        %891 = vmatpush1.msra.mxu0 0.0
        %892 = vmatprep.subr.mxu0 0.0
        %893 = vmatpush1.msra.mxu0 0.0
        %894 = vmatprep.subr.mxu0 0.0
        %895 = vmatpush1.msra.mxu0 0.0
        %896 = vmatprep.subr.mxu0 0.0
        %897 = vmatpush1.msra.mxu0 0.0
        %898 = vmatprep.subr.mxu0 0.0
        %899 = vmatpush1.msra.mxu0 0.0
        %900 = vmatprep.subr.mxu0 0.0
        %901 = vmatpush1.msra.mxu0 0.0
        %902 = vmatprep.subr.mxu0 0.0
        %903 = vmatpush1.msra.mxu0 0.0
        %904 = vmatprep.subr.mxu0 0.0
        %905 = vmatpush1.msra.mxu0 %v869
        %906 = vmatprep.subr.mxu0 0.0
        %907 = vmatpush1.msra.mxu0 %v868
        %908 = vmatprep.subr.mxu0 0.0
        %909 = vmatpush1.msra.mxu0 %v867
        %910 = vmatprep.subr.mxu0 0.0
        %911 = vmatpush1.msra.mxu0 %v866
        %912 = vmatprep.subr.mxu0 0.0
        %913 = vmatpush2.msra.mxu0 0.0
        %914 = vmatprep.subr.mxu0 0.0
        %915 = vmatpush2.msra.mxu0 0.0
        %916 = vmatprep.subr.mxu0 0.0
        %917 = vmatpush2.msra.mxu0 0.0
        %918 = vmatprep.subr.mxu0 0.0
        %919 = vmatpush2.msra.mxu0 0.0
        %920 = vmatprep.subr.mxu0 0.0
        %921 = vmatpush2.msra.mxu0 0.0
        %922 = vmatprep.subr.mxu0 0.0
        %923 = vmatpush2.msra.mxu0 0.0
        %924 = vmatprep.subr.mxu0 0.0
        %925 = vmatpush2.msra.mxu0 0.0
        %926 = vmatprep.subr.mxu0 0.0
        %927 = vmatpush2.msra.mxu0 0.0
        %928 = vmatprep.subr.mxu0 0.0
        %929 = vmatpush2.msra.mxu0 0.0
        %930 = vmatprep.subr.mxu0 0.0
        %931 = vmatpush2.msra.mxu0 0.0
        %932 = vmatprep.subr.mxu0 0.0
        %933 = vmatpush2.msra.mxu0 0.0
        %934 = vmatprep.subr.mxu0 0.0
        %935 = vmatpush2.msra.mxu0 0.0
        %936 = vmatprep.subr.mxu0 0.0
        %937 = vmatpush2.msra.mxu0 0.0
        %938 = vmatprep.subr.mxu0 0.0
        %939 = vmatpush2.msra.mxu0 0.0
        %940 = vmatprep.subr.mxu0 0.0
        %941 = vmatpush2.msra.mxu0 0.0
        %942 = vmatprep.subr.mxu0 0.0
        %943 = vmatpush2.msra.mxu0 0.0
        %944 = vmatprep.mubr.f32.mxu0 0.0
        %945 = vmatmul.mubr.f32.gmra.mxu0 %v878
        %v946 = vpop.f32.mrf.mxu0
        %v947 = vadd.f32 %v875, %v946
        %v948 = vpop.f32.mrf.mxu0
        %949 = vdwg.mxu0
        %v950 = vmax.f32 %v947, 0.0
        %v951 = vld [vmem:[%s397] sm:$0xff]
        %v952 = vld [vmem:[%s397 + $0x8] sm:$0xff]
        %v953 = vld [vmem:[%s397 + $0x10] sm:$0xff]
        %v954 = vld [vmem:[%s397 + $0x18] sm:$0xff]
        %v955 = vld [vmem:[%s397 + $0x20] sm:$0xff]
        %v956 = vld [vmem:[%s397 + $0x28] sm:$0xff]
        %v957 = vld [vmem:[%s397 + $0x30] sm:$0xff]
        %v958 = vld [vmem:[%s397 + $0x38] sm:$0xff]
        %v959 = vld [vmem:[%s400] sm:$0x1]
        %v961 = vlaneseq
        %v962 = vshrl.u32 %v961, 7
        %v963 = vsub.s32 0, %v962
        %v964 = vrot.slane %v959, %v963
        %vm966 = vcmask 523264
        %v968 = vsel %vm966, %v950, 0
        %970 = vmatprep.subr.mxu0 0.0
        %971 = vmatpush1.msra.mxu0 0.0
        %972 = vmatprep.subr.mxu0 0.0
        %973 = vmatpush1.msra.mxu0 0.0
        %974 = vmatprep.subr.mxu0 0.0
        %975 = vmatpush1.msra.mxu0 0.0
        %976 = vmatprep.subr.mxu0 0.0
        %977 = vmatpush1.msra.mxu0 0.0
        %978 = vmatprep.subr.mxu0 0.0
        %979 = vmatpush1.msra.mxu0 0.0
        %980 = vmatprep.subr.mxu0 0.0
        %981 = vmatpush1.msra.mxu0 0.0
        %982 = vmatprep.subr.mxu0 0.0
        %983 = vmatpush1.msra.mxu0 0.0
        %984 = vmatprep.subr.mxu0 0.0
        %985 = vmatpush1.msra.mxu0 0.0
        %986 = vmatprep.subr.mxu0 0.0
        %987 = vmatpush1.msra.mxu0 %v958
        %988 = vmatprep.subr.mxu0 0.0
        %989 = vmatpush1.msra.mxu0 %v957
        %990 = vmatprep.subr.mxu0 0.0
        %991 = vmatpush1.msra.mxu0 %v956
        %992 = vmatprep.subr.mxu0 0.0
        %993 = vmatpush1.msra.mxu0 %v955
        %994 = vmatprep.subr.mxu0 0.0
        %995 = vmatpush1.msra.mxu0 %v954
        %996 = vmatprep.subr.mxu0 0.0
        %997 = vmatpush1.msra.mxu0 %v953
        %998 = vmatprep.subr.mxu0 0.0
        %999 = vmatpush1.msra.mxu0 %v952
        %1000 = vmatprep.subr.mxu0 0.0
        %1001 = vmatpush1.msra.mxu0 %v951
        %1002 = vmatprep.subr.mxu0 0.0
        %1003 = vmatpush2.msra.mxu0 0.0
        %1004 = vmatprep.subr.mxu0 0.0
        %1005 = vmatpush2.msra.mxu0 0.0
        %1006 = vmatprep.subr.mxu0 0.0
        %1007 = vmatpush2.msra.mxu0 0.0
        %1008 = vmatprep.subr.mxu0 0.0
        %1009 = vmatpush2.msra.mxu0 0.0
        %1010 = vmatprep.subr.mxu0 0.0
        %1011 = vmatpush2.msra.mxu0 0.0
        %1012 = vmatprep.subr.mxu0 0.0
        %1013 = vmatpush2.msra.mxu0 0.0
        %1014 = vmatprep.subr.mxu0 0.0
        %1015 = vmatpush2.msra.mxu0 0.0
        %1016 = vmatprep.subr.mxu0 0.0
        %1017 = vmatpush2.msra.mxu0 0.0
        %1018 = vmatprep.subr.mxu0 0.0
        %1019 = vmatpush2.msra.mxu0 0.0
        %1020 = vmatprep.subr.mxu0 0.0
        %1021 = vmatpush2.msra.mxu0 0.0
        %1022 = vmatprep.subr.mxu0 0.0
        %1023 = vmatpush2.msra.mxu0 0.0
        %1024 = vmatprep.subr.mxu0 0.0
        %1025 = vmatpush2.msra.mxu0 0.0
        %1026 = vmatprep.subr.mxu0 0.0
        %1027 = vmatpush2.msra.mxu0 0.0
        %1028 = vmatprep.subr.mxu0 0.0
        %1029 = vmatpush2.msra.mxu0 0.0
        %1030 = vmatprep.subr.mxu0 0.0
        %1031 = vmatpush2.msra.mxu0 0.0
        %1032 = vmatprep.subr.mxu0 0.0
        %1033 = vmatpush2.msra.mxu0 0.0
        %1034 = vmatprep.mubr.f32.mxu0 0.0
        %1035 = vmatmul.mubr.f32.gmra.mxu0 %v968
        %v1036 = vpop.f32.mrf.mxu0
        %v1037 = vadd.f32 %v964, %v1036
        %v1038 = vpop.f32.mrf.mxu0
        %1039 = vdwg.mxu0
        %v1040 = vadd.f32 %v865, %v1037
        %v1041 = vsel %vm420, %v1040, 0.0
        %1042 = vadd.xlane.f32.xlu0 %v1041
        %v1043 = vpop.xlane.xlu0 %1042
        %v1044 = vmul.f32 %v1043, %v841
        %v1045 = vsub.f32 %v1040, %v1044
        %v1046 = vmul.f32 %v1045, %v1045
        %v1047 = vsel %vm420, %v1046, 0.0
        %1048 = vadd.xlane.f32.xlu0 %v1047
        %v1049 = vpop.xlane.xlu0 %1048
        %v1050 = vmul.f32 %v1049, %v841
        %v1051 = vadd.f32 %v1050, 1e-05
        %v1052 = vrsqrt.pop %v1051
        %v1053 = vmul.f32 %v1045, %v1052
        %v1054 = vmul.f32 %v1053, %v856
        %v1055 = vadd.f32 %v1054, %v863
        %1056 = vst.msk [vmem:[#allocation2] sm:$0xff] %vm420, %v1055
        %p1057 = scmp.eq.s32.totalorder %s21, 1
        // Predicated region
        $region61: #{tpu_custom_call.1} parent=55 // pred_check
          %p1058 = pneg %p1057
        $region62: #{tpu_custom_call.1} parent=55 // pred_check_branch
          %1060 = sbr.rel (%p1058) target = $region64
        $region63: #{tpu_custom_call.1} parent=55 // pred_region
          %1061 = vst.msk [vmem:[#allocation4] sm:$0xff] %vm420, %v1055
        $region64: #{tpu_custom_call.1} parent=55 // pred_fallthru
          _
        // Predicated region
        $region65: #{tpu_custom_call.1} parent=55 // pred_check
          %p1062 = pneg %p253
        $region66: #{tpu_custom_call.1} parent=55 // pred_check_branch
          %1064 = sbr.rel (%p1062) target = $region68
        $region67: #{tpu_custom_call.1} parent=55 // pred_region
          %s1066 = ssub.s32 128, 128
          %1067 = vsyncadd [#allocation5], %s1066
          %s1069 = sshll.u32 [#allocation4], 4
          %s1070 = int_to_ptr.vmem [resolvable:$true] %s1069
          %1072 = dma.vmem_to_hbm [thread:$0]  %s1070, 128, %s9, [#allocation5]
        $region68: #{tpu_custom_call.1} parent=55 // pred_fallthru
          _
        // Predicated region
        $region69: #{tpu_custom_call.1} parent=55 // pred_check
          %p1073 = pneg %p253
        $region70: #{tpu_custom_call.1} parent=55 // pred_check_branch
          %1075 = sbr.rel (%p1073) target = $region72
        $region71: #{tpu_custom_call.1} parent=55 // pred_region
          %1076 = dma.done [#allocation5], 128
        $region72: #{tpu_custom_call.1} parent=55 // pred_fallthru
          _
      $region56: #{tpu_custom_call.1} parent=5 // pred_fallthru
        _
      %p1077 = scmp.le.s32.totalorder 2, %s16
      // Predicated region
      $region73: #{tpu_custom_call.1} parent=5 // pred_check
        %p1078 = pneg %p1077
      $region74: #{tpu_custom_call.1} parent=5 // pred_check_branch
        %1080 = sbr.rel (%p1078) target = $region76
      $region75: #{tpu_custom_call.1} parent=5 // pred_region
        %s1081 = ssub.s32 %s16, 2
      $region76: #{tpu_custom_call.1} parent=5 // pred_fallthru
        _
    $region6: #{tpu_custom_call.1} parent=1 // loop_footer
      %s20 = sadd.s32 1, %s16
    $region7: #{tpu_custom_call.1} parent=1 // loop_footer_branch
      %15 = sbr.rel target = $region3
    $region8: #{tpu_custom_call.1} parent=1 // loop_exit
      _
    %1082 = vsyncpa [#allocation5], 1
    %s1083 = scalar_lea.sflag [#allocation5], 1
    %1084 = vsyncpa %s1083, 1

</llo_original>
